<compile_context>
chip_gen: v7x
topology: tpu7x:2x2x1
jax: 0.10.0
libtpu: 0.0.40
codegen_flags: <defaults>
</compile_context>

<pallas_src>
import math

import jax
import jax.numpy as jnp
from jax.experimental import pallas as pl
from jax.experimental.pallas import tpu as pltpu


def make_gaussian_kernel(kernel_size, sigma, dim):
    """Verbatim jnp re-implementation of GaussianSmoothing.__init__ (2-D weight).
    Used only for the reference check in __main__."""
    if isinstance(kernel_size, (int, float)):
        kernel_size = [int(kernel_size)] * dim
    if isinstance(sigma, (int, float)):
        sigma = [float(sigma)] * dim
    meshgrids = jnp.meshgrid(
        *[jnp.arange(size, dtype=jnp.float32) for size in kernel_size],
        indexing="ij",
    )
    kernel = jnp.ones((), dtype=jnp.float32)
    for size, std, mgrid in zip(kernel_size, sigma, meshgrids):
        mean = (size - 1) / 2.0
        # NOTE: original module divides by (2*std) inside the square; kept verbatim.
        kernel = kernel * (
            1.0 / (std * math.sqrt(2.0 * math.pi))
            * jnp.exp(-(((mgrid - mean) / (2.0 * std)) ** 2))
        )
    kernel = kernel / jnp.sum(kernel)
    return kernel  # (K, K) for dim=2


def make_gaussian_factors_1d(kernel_size, sigma, dim):
    """Per-axis 1-D factors (Python floats) whose outer product equals the module's
    normalized 2-D kernel (each factor normalized by its own sum)."""
    if isinstance(kernel_size, (int, float)):
        kernel_size = [int(kernel_size)] * dim
    if isinstance(sigma, (int, float)):
        sigma = [float(sigma)] * dim
    factors = []
    for size, std in zip(kernel_size, sigma):
        mean = (size - 1) / 2.0
        g = [
            1.0 / (std * math.sqrt(2.0 * math.pi))
            * math.exp(-(((i - mean) / (2.0 * std)) ** 2))
            for i in range(size)
        ]
        s = sum(g)
        factors.append([v / s for v in g])
    return list(kernel_size), factors


def _band_matrix(shape, taps, in_axis):
    """Static banded taps matrix, built from float immediates (no memory input).

    in_axis=0: M[j + r, r] = taps[j]  ->  X @ M  is a valid 1-D conv of each ROW of X.
    in_axis=1: M[r, j + r] = taps[j]  ->  M @ X  is a valid 1-D conv of each COLUMN of X.
    """
    idx_in = jax.lax.broadcasted_iota(jnp.int32, shape, in_axis)
    idx_out = jax.lax.broadcasted_iota(jnp.int32, shape, 1 - in_axis)
    d = idx_in - idx_out
    m = jnp.zeros(shape, jnp.float32)
    for j, g in enumerate(taps):
        m = m + jnp.where(d == j, jnp.float32(g), jnp.float32(0.0))
    return m


def _make_conv_kernel(C, H, W, Kh, Kw, gh, gw):
    """Separable valid depthwise conv on an NCHW block, both passes on the MXU."""
    Ho, Wo = H - Kh + 1, W - Kw + 1

    def conv_kernel(x_ref, o_ref):
        # Tiny taps matrices: built once per grid step (hoisted out of the channel
        # loop), a handful of VPU select ops — free filler next to the MXU work.
        s_w = _band_matrix((W, Wo), gw, in_axis=0)    # (W, Wo)
        s_ht = _band_matrix((Ho, H), gh, in_axis=1)   # (Ho, H)
        for c in range(C):                            # static, unrolled (C is small)
            xc = x_ref[0, c]                          # (H, W) — W on the lane axis
            # W pass: rows of xc convolved with gw  -> (H, Wo)
            t = jnp.dot(xc, s_w, preferred_element_type=jnp.float32)
            # H pass: columns of t convolved with gh -> (Ho, Wo)
            o_ref[0, c] = jnp.dot(s_ht, t, preferred_element_type=jnp.float32)

    return conv_kernel, Ho, Wo


def gaussian_smoothing(x, kernel_size, sigma, dim=2):
    """x: (N, C, H, W) f32 -> (N, C, H-Kh+1, W-Kw+1) f32 (valid depthwise conv).

    Same forward semantics as GaussianSmoothing(channels=C, kernel_size, sigma, dim=2).
    """
    assert dim == 2, "this Pallas kernel implements the dim=2 (conv2d) path"
    N, C, H, W = x.shape
    (Kh, Kw), (gh, gw) = make_gaussian_factors_1d(kernel_size, sigma, dim)
    conv_kernel, Ho, Wo = _make_conv_kernel(C, H, W, Kh, Kw, gh, gw)

    # NOTE: for large H/W, add an H-tile grid axis with a (Kh-1)-row halo and
    # pad/tile W toward a multiple of 128 (size tiles per-chip: ~16/32/32 MiB
    # scoped VMEM on v5e/v6e/v7x).  At this toy size one (1,C,H,W) ~4 KiB block
    # per step is already optimal and fits every generation's defaults.
    return pl.pallas_call(
        conv_kernel,
        out_shape=jax.ShapeDtypeStruct((N, C, Ho, Wo), jnp.float32),
        grid=(N,),  # N>=2 feeds both v7x TensorCores; v5e/v6e just loop N steps
        in_specs=[pl.BlockSpec((1, C, H, W), lambda n: (n, 0, 0, 0))],
        out_specs=pl.BlockSpec((1, C, Ho, Wo), lambda n: (n, 0, 0, 0)),
        compiler_params=pltpu.CompilerParams(
            dimension_semantics=("parallel",),
        ),
    )(x)


if __name__ == "__main__":
    # Module config: channels=4, kernel_size=5, sigma=1.0, dim=2
    channels, kernel_size, sigma, dim = 4, 5, 1.0, 2

    key = jax.random.PRNGKey(0)
    x = jax.random.normal(key, (2, channels, 16, 16), dtype=jnp.float32)

    out = gaussian_smoothing(x, kernel_size, sigma, dim)
    out = jax.block_until_ready(out)

    # Reference: XLA grouped conv with the module's verbatim 2-D weight build.
    weight2d = make_gaussian_kernel(kernel_size, sigma, dim)          # (5, 5)
    w_full = jnp.tile(weight2d[None, None], (channels, 1, 1, 1))      # (C,1,K,K)
    ref = jax.lax.conv_general_dilated(
        x, w_full, window_strides=(1, 1), padding="VALID",
        dimension_numbers=("NCHW", "OIHW", "NCHW"),
        feature_group_count=channels,
        precision=jax.lax.Precision.HIGHEST,
    )
    assert out.shape == (2, channels, 12, 12)
    assert jnp.allclose(out, ref, atol=2e-5), "mismatch vs reference conv"
    print("KERNEL_OK")
</pallas_src>

<mosaic_0001>
module attributes {stable_mosaic.version = 11 : i64} {
  func.func @conv_kernel(%arg0: i32, %arg1: memref<1x4x16x16xf32, #tpu.memory_space<vmem>>, %arg2: memref<1x4x12x12xf32, #tpu.memory_space<vmem>>) attributes {dimension_semantics = [#tpu.dimension_semantics<parallel>], iteration_bounds = array<i64: 2>, scalar_prefetch = 0 : i64, scratch_operands = 0 : i64, tpu.core_type = #tpu.core_type<tc>, window_params = [{transform_indices = @transform_0, window_bounds = array<i64: 1, 4, 16, 16>}, {transform_indices = @transform_1, window_bounds = array<i64: 1, 4, 12, 12>}]} {
    %0 = tpu.iota {dimensions = array<i32: 0>} : vector<16x12xi32>
    %1 = tpu.iota {dimensions = array<i32: 1>} : vector<16x12xi32>
    %2 = arith.subi %0, %1 : vector<16x12xi32>
    %cst = arith.constant 0.000000e+00 : f32
    %3 = vector.broadcast %cst : f32 to vector<16x12xf32>
    %c0_i32 = arith.constant 0 : i32
    %4 = vector.broadcast %c0_i32 : i32 to vector<16x12xi32>
    %5 = arith.cmpi eq, %2, %4 : vector<16x12xi32>
    %cst_0 = arith.constant 0.111703366 : f32
    %cst_1 = arith.constant 0.000000e+00 : f32
    %6 = vector.broadcast %cst_0 : f32 to vector<16x12xf32>
    %7 = vector.broadcast %cst_1 : f32 to vector<16x12xf32>
    %8 = arith.select %5, %6, %7 : vector<16x12xi1>, vector<16x12xf32>
    %9 = arith.addf %3, %8 : vector<16x12xf32>
    %c1_i32 = arith.constant 1 : i32
    %10 = vector.broadcast %c1_i32 : i32 to vector<16x12xi32>
    %11 = arith.cmpi eq, %2, %10 : vector<16x12xi32>
    %cst_2 = arith.constant 0.236476019 : f32
    %cst_3 = arith.constant 0.000000e+00 : f32
    %12 = vector.broadcast %cst_2 : f32 to vector<16x12xf32>
    %13 = vector.broadcast %cst_3 : f32 to vector<16x12xf32>
    %14 = arith.select %11, %12, %13 : vector<16x12xi1>, vector<16x12xf32>
    %15 = arith.addf %9, %14 : vector<16x12xf32>
    %c2_i32 = arith.constant 2 : i32
    %16 = vector.broadcast %c2_i32 : i32 to vector<16x12xi32>
    %17 = arith.cmpi eq, %2, %16 : vector<16x12xi32>
    %cst_4 = arith.constant 0.30364123 : f32
    %cst_5 = arith.constant 0.000000e+00 : f32
    %18 = vector.broadcast %cst_4 : f32 to vector<16x12xf32>
    %19 = vector.broadcast %cst_5 : f32 to vector<16x12xf32>
    %20 = arith.select %17, %18, %19 : vector<16x12xi1>, vector<16x12xf32>
    %21 = arith.addf %15, %20 : vector<16x12xf32>
    %c3_i32 = arith.constant 3 : i32
    %22 = vector.broadcast %c3_i32 : i32 to vector<16x12xi32>
    %23 = arith.cmpi eq, %2, %22 : vector<16x12xi32>
    %cst_6 = arith.constant 0.236476019 : f32
    %cst_7 = arith.constant 0.000000e+00 : f32
    %24 = vector.broadcast %cst_6 : f32 to vector<16x12xf32>
    %25 = vector.broadcast %cst_7 : f32 to vector<16x12xf32>
    %26 = arith.select %23, %24, %25 : vector<16x12xi1>, vector<16x12xf32>
    %27 = arith.addf %21, %26 : vector<16x12xf32>
    %c4_i32 = arith.constant 4 : i32
    %28 = vector.broadcast %c4_i32 : i32 to vector<16x12xi32>
    %29 = arith.cmpi eq, %2, %28 : vector<16x12xi32>
    %cst_8 = arith.constant 0.111703366 : f32
    %cst_9 = arith.constant 0.000000e+00 : f32
    %30 = vector.broadcast %cst_8 : f32 to vector<16x12xf32>
    %31 = vector.broadcast %cst_9 : f32 to vector<16x12xf32>
    %32 = arith.select %29, %30, %31 : vector<16x12xi1>, vector<16x12xf32>
    %33 = arith.addf %27, %32 : vector<16x12xf32>
    %34 = tpu.iota {dimensions = array<i32: 1>} : vector<12x16xi32>
    %35 = tpu.iota {dimensions = array<i32: 0>} : vector<12x16xi32>
    %36 = arith.subi %34, %35 : vector<12x16xi32>
    %cst_10 = arith.constant 0.000000e+00 : f32
    %37 = vector.broadcast %cst_10 : f32 to vector<12x16xf32>
    %c0_i32_11 = arith.constant 0 : i32
    %38 = vector.broadcast %c0_i32_11 : i32 to vector<12x16xi32>
    %39 = arith.cmpi eq, %36, %38 : vector<12x16xi32>
    %cst_12 = arith.constant 0.111703366 : f32
    %cst_13 = arith.constant 0.000000e+00 : f32
    %40 = vector.broadcast %cst_12 : f32 to vector<12x16xf32>
    %41 = vector.broadcast %cst_13 : f32 to vector<12x16xf32>
    %42 = arith.select %39, %40, %41 : vector<12x16xi1>, vector<12x16xf32>
    %43 = arith.addf %37, %42 : vector<12x16xf32>
    %c1_i32_14 = arith.constant 1 : i32
    %44 = vector.broadcast %c1_i32_14 : i32 to vector<12x16xi32>
    %45 = arith.cmpi eq, %36, %44 : vector<12x16xi32>
    %cst_15 = arith.constant 0.236476019 : f32
    %cst_16 = arith.constant 0.000000e+00 : f32
    %46 = vector.broadcast %cst_15 : f32 to vector<12x16xf32>
    %47 = vector.broadcast %cst_16 : f32 to vector<12x16xf32>
    %48 = arith.select %45, %46, %47 : vector<12x16xi1>, vector<12x16xf32>
    %49 = arith.addf %43, %48 : vector<12x16xf32>
    %c2_i32_17 = arith.constant 2 : i32
    %50 = vector.broadcast %c2_i32_17 : i32 to vector<12x16xi32>
    %51 = arith.cmpi eq, %36, %50 : vector<12x16xi32>
    %cst_18 = arith.constant 0.30364123 : f32
    %cst_19 = arith.constant 0.000000e+00 : f32
    %52 = vector.broadcast %cst_18 : f32 to vector<12x16xf32>
    %53 = vector.broadcast %cst_19 : f32 to vector<12x16xf32>
    %54 = arith.select %51, %52, %53 : vector<12x16xi1>, vector<12x16xf32>
    %55 = arith.addf %49, %54 : vector<12x16xf32>
    %c3_i32_20 = arith.constant 3 : i32
    %56 = vector.broadcast %c3_i32_20 : i32 to vector<12x16xi32>
    %57 = arith.cmpi eq, %36, %56 : vector<12x16xi32>
    %cst_21 = arith.constant 0.236476019 : f32
    %cst_22 = arith.constant 0.000000e+00 : f32
    %58 = vector.broadcast %cst_21 : f32 to vector<12x16xf32>
    %59 = vector.broadcast %cst_22 : f32 to vector<12x16xf32>
    %60 = arith.select %57, %58, %59 : vector<12x16xi1>, vector<12x16xf32>
    %61 = arith.addf %55, %60 : vector<12x16xf32>
    %c4_i32_23 = arith.constant 4 : i32
    %62 = vector.broadcast %c4_i32_23 : i32 to vector<12x16xi32>
    %63 = arith.cmpi eq, %36, %62 : vector<12x16xi32>
    %cst_24 = arith.constant 0.111703366 : f32
    %cst_25 = arith.constant 0.000000e+00 : f32
    %64 = vector.broadcast %cst_24 : f32 to vector<12x16xf32>
    %65 = vector.broadcast %cst_25 : f32 to vector<12x16xf32>
    %66 = arith.select %63, %64, %65 : vector<12x16xi1>, vector<12x16xf32>
    %67 = arith.addf %61, %66 : vector<12x16xf32>
    %c0 = arith.constant 0 : index
    %c0_26 = arith.constant 0 : index
    %c0_27 = arith.constant 0 : index
    %c0_28 = arith.constant 0 : index
    %68 = vector.load %arg1[%c0, %c0_26, %c0_27, %c0_28] : memref<1x4x16x16xf32, #tpu.memory_space<vmem>>, vector<1x1x16x16xf32>
    %69 = vector.shape_cast %68 : vector<1x1x16x16xf32> to vector<16x16xf32>
    %cst_29 = arith.constant dense<0.000000e+00> : vector<16x12xf32>
    %70 = tpu.matmul %69, %33, %cst_29 {dimension_numbers = #tpu.dot_dimension_numbers<[1], [0], [0], [1], [0, 0, 1, 1], [], []>} : vector<16x16xf32>, vector<16x12xf32>, vector<16x12xf32> -> vector<16x12xf32>
    %cst_30 = arith.constant dense<0.000000e+00> : vector<12x12xf32>
    %71 = tpu.matmul %67, %70, %cst_30 {dimension_numbers = #tpu.dot_dimension_numbers<[1], [0], [0], [1], [0, 0, 1, 1], [], []>} : vector<12x16xf32>, vector<16x12xf32>, vector<12x12xf32> -> vector<12x12xf32>
    %c0_31 = arith.constant 0 : index
    %c0_32 = arith.constant 0 : index
    %c0_33 = arith.constant 0 : index
    %c0_34 = arith.constant 0 : index
    %72 = vector.load %arg2[%c0_31, %c0_32, %c0_33, %c0_34] : memref<1x4x12x12xf32, #tpu.memory_space<vmem>>, vector<1x1x12x12xf32>
    %73 = vector.shape_cast %72 : vector<1x1x12x12xf32> to vector<12x12xf32>
    %74 = vector.shape_cast %71 : vector<12x12xf32> to vector<1x1x12x12xf32>
    tpu.vector_store %arg2[%c0_31, %c0_32, %c0_33, %c0_34], %74 {strides = array<i32>} : memref<1x4x12x12xf32, #tpu.memory_space<vmem>>, vector<1x1x12x12xf32>,
    %c0_35 = arith.constant 0 : index
    %c1 = arith.constant 1 : index
    %c0_36 = arith.constant 0 : index
    %c0_37 = arith.constant 0 : index
    %75 = vector.load %arg1[%c0_35, %c1, %c0_36, %c0_37] : memref<1x4x16x16xf32, #tpu.memory_space<vmem>>, vector<1x1x16x16xf32>
    %76 = vector.shape_cast %75 : vector<1x1x16x16xf32> to vector<16x16xf32>
    %cst_38 = arith.constant dense<0.000000e+00> : vector<16x12xf32>
    %77 = tpu.matmul %76, %33, %cst_38 {dimension_numbers = #tpu.dot_dimension_numbers<[1], [0], [0], [1], [0, 0, 1, 1], [], []>} : vector<16x16xf32>, vector<16x12xf32>, vector<16x12xf32> -> vector<16x12xf32>
    %cst_39 = arith.constant dense<0.000000e+00> : vector<12x12xf32>
    %78 = tpu.matmul %67, %77, %cst_39 {dimension_numbers = #tpu.dot_dimension_numbers<[1], [0], [0], [1], [0, 0, 1, 1], [], []>} : vector<12x16xf32>, vector<16x12xf32>, vector<12x12xf32> -> vector<12x12xf32>
    %c0_40 = arith.constant 0 : index
    %c1_41 = arith.constant 1 : index
    %c0_42 = arith.constant 0 : index
    %c0_43 = arith.constant 0 : index
    %79 = vector.load %arg2[%c0_40, %c1_41, %c0_42, %c0_43] : memref<1x4x12x12xf32, #tpu.memory_space<vmem>>, vector<1x1x12x12xf32>
    %80 = vector.shape_cast %79 : vector<1x1x12x12xf32> to vector<12x12xf32>
    %81 = vector.shape_cast %78 : vector<12x12xf32> to vector<1x1x12x12xf32>
    tpu.vector_store %arg2[%c0_40, %c1_41, %c0_42, %c0_43], %81 {strides = array<i32>} : memref<1x4x12x12xf32, #tpu.memory_space<vmem>>, vector<1x1x12x12xf32>,
    %c0_44 = arith.constant 0 : index
    %c2 = arith.constant 2 : index
    %c0_45 = arith.constant 0 : index
    %c0_46 = arith.constant 0 : index
    %82 = vector.load %arg1[%c0_44, %c2, %c0_45, %c0_46] : memref<1x4x16x16xf32, #tpu.memory_space<vmem>>, vector<1x1x16x16xf32>
    %83 = vector.shape_cast %82 : vector<1x1x16x16xf32> to vector<16x16xf32>
    %cst_47 = arith.constant dense<0.000000e+00> : vector<16x12xf32>
    %84 = tpu.matmul %83, %33, %cst_47 {dimension_numbers = #tpu.dot_dimension_numbers<[1], [0], [0], [1], [0, 0, 1, 1], [], []>} : vector<16x16xf32>, vector<16x12xf32>, vector<16x12xf32> -> vector<16x12xf32>
    %cst_48 = arith.constant dense<0.000000e+00> : vector<12x12xf32>
    %85 = tpu.matmul %67, %84, %cst_48 {dimension_numbers = #tpu.dot_dimension_numbers<[1], [0], [0], [1], [0, 0, 1, 1], [], []>} : vector<12x16xf32>, vector<16x12xf32>, vector<12x12xf32> -> vector<12x12xf32>
    %c0_49 = arith.constant 0 : index
    %c2_50 = arith.constant 2 : index
    %c0_51 = arith.constant 0 : index
    %c0_52 = arith.constant 0 : index
    %86 = vector.load %arg2[%c0_49, %c2_50, %c0_51, %c0_52] : memref<1x4x12x12xf32, #tpu.memory_space<vmem>>, vector<1x1x12x12xf32>
    %87 = vector.shape_cast %86 : vector<1x1x12x12xf32> to vector<12x12xf32>
    %88 = vector.shape_cast %85 : vector<12x12xf32> to vector<1x1x12x12xf32>
    tpu.vector_store %arg2[%c0_49, %c2_50, %c0_51, %c0_52], %88 {strides = array<i32>} : memref<1x4x12x12xf32, #tpu.memory_space<vmem>>, vector<1x1x12x12xf32>,
    %c0_53 = arith.constant 0 : index
    %c3 = arith.constant 3 : index
    %c0_54 = arith.constant 0 : index
    %c0_55 = arith.constant 0 : index
    %89 = vector.load %arg1[%c0_53, %c3, %c0_54, %c0_55] : memref<1x4x16x16xf32, #tpu.memory_space<vmem>>, vector<1x1x16x16xf32>
    %90 = vector.shape_cast %89 : vector<1x1x16x16xf32> to vector<16x16xf32>
    %cst_56 = arith.constant dense<0.000000e+00> : vector<16x12xf32>
    %91 = tpu.matmul %90, %33, %cst_56 {dimension_numbers = #tpu.dot_dimension_numbers<[1], [0], [0], [1], [0, 0, 1, 1], [], []>} : vector<16x16xf32>, vector<16x12xf32>, vector<16x12xf32> -> vector<16x12xf32>
    %cst_57 = arith.constant dense<0.000000e+00> : vector<12x12xf32>
    %92 = tpu.matmul %67, %91, %cst_57 {dimension_numbers = #tpu.dot_dimension_numbers<[1], [0], [0], [1], [0, 0, 1, 1], [], []>} : vector<12x16xf32>, vector<16x12xf32>, vector<12x12xf32> -> vector<12x12xf32>
    %c0_58 = arith.constant 0 : index
    %c3_59 = arith.constant 3 : index
    %c0_60 = arith.constant 0 : index
    %c0_61 = arith.constant 0 : index
    %93 = vector.load %arg2[%c0_58, %c3_59, %c0_60, %c0_61] : memref<1x4x12x12xf32, #tpu.memory_space<vmem>>, vector<1x1x12x12xf32>
    %94 = vector.shape_cast %93 : vector<1x1x12x12xf32> to vector<12x12xf32>
    %95 = vector.shape_cast %92 : vector<12x12xf32> to vector<1x1x12x12xf32>
    tpu.vector_store %arg2[%c0_58, %c3_59, %c0_60, %c0_61], %95 {strides = array<i32>} : memref<1x4x12x12xf32, #tpu.memory_space<vmem>>, vector<1x1x12x12xf32>,
    return
  }
  func.func @transform_0(%arg0: i32) -> (i32, i32, i32, i32) {
    %c0_i32 = arith.constant 0 : i32
    %c0_i32_0 = arith.constant 0 : i32
    %c0_i32_1 = arith.constant 0 : i32
    %c0_i32_2 = arith.constant 0 : i32
    return %arg0, %c0_i32, %c0_i32_0, %c0_i32_1 : i32, i32, i32, i32
  }
  func.func @transform_1(%arg0: i32) -> (i32, i32, i32, i32) {
    %c0_i32 = arith.constant 0 : i32
    %c0_i32_0 = arith.constant 0 : i32
    %c0_i32_1 = arith.constant 0 : i32
    %c0_i32_2 = arith.constant 0 : i32
    return %arg0, %c0_i32, %c0_i32_0, %c0_i32_1 : i32, i32, i32, i32
  }
}

</mosaic_0001>

<llo_original>
// kernel: tpu_custom_call.1
$region0: #{tpu_custom_call.1}
  #allocation0 [shape = 'u32[]', space=smem, size = 0x4, offset = 0x4, fixed_abs, tag = 'smem constant byte address 0x4 - core index']
  #allocation1 [shape = 'u32[144,128]{1,0:T(1,128)}', space=vmem, size = 0x12000, scoped, tag = 'internal scratch']
  %s0 = inlined_call_operand.hbm [shape: f32[2,4,16,16], index: 0, kind: input, shape index: {}]
  %s1 = inlined_call_operand.vmem [shape: f32[2,4,12,12], index: 1, kind: output, shape index: {}]
  %s2 = sld [smem:[#allocation0]]
  $region41: #{tpu_custom_call.1} parent=0
    _
  %s4 = ssub.s32 1, %s2
  %s5 = scalar_select 0, %s4, %s2
  $region1: #{tpu_custom_call.1} parent=0
    #allocation2 [shape = 'u8[65536]{0}', space=vmem, size = 0x10000, scoped, tag = 'input window, operand 0']
    #allocation3 [shape = 's32[2]{0}', space=sflag, size = 0x8, scoped, tag = 'scoped memory for tpu_custom_call.1']
    %6 = vsyncpa [#allocation3], 0
    %s7 = scalar_lea.sflag [#allocation3], 1
    %8 = vsyncpa %s7, 0
    loop: start=0, step=1, limit=4
    $region2: #{tpu_custom_call.1} parent=1 // loop_pre_header
      _
    $region3: #{tpu_custom_call.1} parent=1 // loop_header
      %s10 = sphi 0, %s14
      %p11 = scmp.ge.s32.totalorder %s10, 4
      %s20 = sphi 0, %s22
      %s23 = sphi 0, %s20
      %s24 = sphi 0, %s23
      %s40 = sphi 0, %s24
      %s46 = sphi 0, %s48
      %s49 = sphi 0, %s46
      %s50 = sphi 0, %s49
      %s66 = sphi 0, %s50
    $region4: #{tpu_custom_call.1} parent=1 // loop_header_branch
      %13 = sbr.rel (%p11) target = $region8
    $region5: #{tpu_custom_call.1} parent=1 // loop_body
      %s15 = ssub.s32 %s10, 1
      %s16 = ssub.s32 %s10, 2
      %s17 = sadd.s32 %s10, 1
      %s18 = ssub.s32 %s10, %s17
      %p19 = scmp.eq.s32.totalorder %s18, 0
      %s21 = sadd.s32 %s20, 1
      %s22 = scalar_select %p19, %s20, %s21
      %p25 = pneg %p19
      %p26 = scmp.eq.s32.totalorder %s10, 1
      %p27 = por %p25, %p26
      %p28 = scmp.ne.s32.totalorder %s20, %s23
      %p29 = scmp.eq.s32.totalorder %s10, 0
      %p30 = por %p28, %p29
      %p31 = scmp.ne.s32.totalorder %s20, %s23
      %p32 = scmp.eq.s32.totalorder %s15, 1
      %p33 = por %p31, %p32
      %p34 = scmp.ne.s32.totalorder %s23, %s24
      %p35 = scmp.eq.s32.totalorder %s15, 0
      %p36 = por %p34, %p35
      %p37 = scmp.ne.s32.totalorder %s23, %s24
      %p38 = scmp.eq.s32.totalorder %s16, 1
      %p39 = por %p37, %p38
      %p41 = scmp.ne.s32.totalorder %s24, %s40
      %p42 = scmp.eq.s32.totalorder %s16, 0
      %p43 = por %p41, %p42
      %s44 = ssub.s32 %s10, %s17
      %p45 = scmp.eq.s32.totalorder %s44, 0
      %s47 = sadd.s32 %s46, 1
      %s48 = scalar_select %p45, %s46, %s47
      %p51 = pneg %p45
      %p52 = scmp.eq.s32.totalorder %s10, 1
      %p53 = por %p51, %p52
      %p54 = scmp.ne.s32.totalorder %s46, %s49
      %p55 = scmp.eq.s32.totalorder %s10, 0
      %p56 = por %p54, %p55
      %p57 = scmp.ne.s32.totalorder %s46, %s49
      %p58 = scmp.eq.s32.totalorder %s15, 1
      %p59 = por %p57, %p58
      %p60 = scmp.ne.s32.totalorder %s49, %s50
      %p61 = scmp.eq.s32.totalorder %s15, 0
      %p62 = por %p60, %p61
      %p63 = scmp.ne.s32.totalorder %s49, %s50
      %p64 = scmp.eq.s32.totalorder %s16, 1
      %p65 = por %p63, %p64
      %p67 = scmp.ne.s32.totalorder %s50, %s66
      %p68 = scmp.eq.s32.totalorder %s16, 0
      %p69 = por %p67, %p68
      %p70 = scmp.le.s32.totalorder 1, %s10
      %p71 = scmp.lt.s32.totalorder %s10, 3
      %p72 = pnand %p70, %p71
      %p73 = pneg %p72
      // Predicated region
      $region9: #{tpu_custom_call.1} parent=5 // pred_check
        _
      $region10: #{tpu_custom_call.1} parent=5 // pred_check_branch
        %75 = sbr.rel (%p72) target = $region12
      $region11: #{tpu_custom_call.1} parent=5 // pred_region
        %s76 = ssub.s32 %s10, 1
      $region12: #{tpu_custom_call.1} parent=5 // pred_fallthru
        _
      %p77 = scmp.lt.s32.totalorder %s10, 2
      // Predicated region
      $region13: #{tpu_custom_call.1} parent=5 // pred_check
        %p78 = pneg %p77
      $region14: #{tpu_custom_call.1} parent=5 // pred_check_branch
        %80 = sbr.rel (%p78) target = $region16
      $region15: #{tpu_custom_call.1} parent=5 // pred_region
        // Predicated region
        $region17: #{tpu_custom_call.1} parent=15 // pred_check
          %p81 = pneg %p30
        $region18: #{tpu_custom_call.1} parent=15 // pred_check_branch
          %83 = sbr.rel (%p81) target = $region20
        $region19: #{tpu_custom_call.1} parent=15 // pred_region
          %s84 = sand.u32 %s20, 1
          %s85 = scalar_lea.sflag [#allocation3], %s84
          %s86 = sand.u32 %s20, 1
          %s87 = smul.addr %s86, 64
          %s88 = scalar_lea.vmem [#allocation2], %s87
          %s90 = ssub.s32 1024, 1024
          %91 = vsyncadd %s85, %s90
          %s92 = smul.addr %s10, 8
          %s93 = smul.addr %s92, 128
          %s94 = scalar_lea.hbm %s0, %s93
          %s95 = sshll.u32 %s88, 4
          %s96 = int_to_ptr.vmem [resolvable:$true] %s95
          %101 = dma.hbm_to_vmem [thread:$0]  %s94, 1024, %s96, %s85, 128, 128, 8
        $region20: #{tpu_custom_call.1} parent=15 // pred_fallthru
          _
      $region16: #{tpu_custom_call.1} parent=5 // pred_fallthru
        _
      %p102 = scmp.le.s32.totalorder 1, %s10
      %p103 = scmp.lt.s32.totalorder %s10, 3
      %p104 = pnand %p102, %p103
      %p105 = pneg %p104
      // Predicated region
      $region21: #{tpu_custom_call.1} parent=5 // pred_check
        _
      $region22: #{tpu_custom_call.1} parent=5 // pred_check_branch
        %107 = sbr.rel (%p104) target = $region24
      $region23: #{tpu_custom_call.1} parent=5 // pred_region
        %s108 = ssub.s32 %s10, 1
        %s109 = sand.u32 %s23, 1
        %s110 = scalar_lea.sflag [#allocation3], %s109
        %s111 = sand.u32 %s23, 1
        %s112 = smul.addr %s111, 64
        %s113 = scalar_lea.vmem [#allocation2], %s112
        // Predicated region
        $region25: #{tpu_custom_call.1} parent=23 // pred_check
          %p114 = pneg %p36
        $region26: #{tpu_custom_call.1} parent=23 // pred_check_branch
          %116 = sbr.rel (%p114) target = $region28
        $region27: #{tpu_custom_call.1} parent=23 // pred_region
          %117 = dma.done %s110, 1024
        $region28: #{tpu_custom_call.1} parent=23 // pred_fallthru
          _
        %s118 = sand.u32 %s23, 1
        %s119 = scalar_lea.sflag [#allocation3], %s118
        %s120 = sand.u32 %s23, 1
        %s121 = smul.addr %s120, 64
        %s122 = scalar_lea.vmem [#allocation2], %s121
        %p123 = pneg %p36
        %p124 = pneg %p33
        %p125 = pneg %p62
        %p126 = pneg %p59
        %p127 = scmp.lt.s32.totalorder %s15, 1
        %s128 = scalar_select %p127, %s15, 1
        %s129 = smul.addr %s128, 8
        %s130 = smul.addr %s129, 8
        %s131 = scalar_lea.vmem %s1, %s130
        %p132 = scmp.lt.s32.totalorder %s15, 1
        %s133 = scalar_select %p132, %s15, 1
        %s134 = smul.addr %s133, 8
        %s135 = smul.addr %s134, 8
        %s136 = scalar_lea.vmem %s1, %s135
        %v137 = vlaneseq
        %v138 = vshrl.u32 %v137, 7
        %v139 = vadd.s32 %v138, 8
        %v140 = vlaneseq
        %v141 = vand.u32 %v140, 127
        %v142 = vsub.s32 %v138, %v141
        %v143 = vsub.s32 %v139, %v141
        %vm144 = vcmp.eq.s32.totalorder %v142, 0
        %vm145 = vcmp.eq.s32.totalorder %v143, 0
        %v146 = vsel %vm144, 0.111703366, 0.0
        %v147 = vsel %vm145, 0.111703366, 0.0
        %v148 = vadd.f32 %v146, 0.0
        %v149 = vadd.f32 %v147, 0.0
        %vm150 = vcmp.eq.s32.totalorder %v142, 1
        %vm151 = vcmp.eq.s32.totalorder %v143, 1
        %v152 = vsel %vm150, 0.23647602, 0.0
        %v153 = vsel %vm151, 0.23647602, 0.0
        %v154 = vadd.f32 %v148, %v152
        %v155 = vadd.f32 %v149, %v153
        %vm156 = vcmp.eq.s32.totalorder %v142, 2
        %vm157 = vcmp.eq.s32.totalorder %v143, 2
        %v158 = vsel %vm156, 0.30364123, 0.0
        %v159 = vsel %vm157, 0.30364123, 0.0
        %v160 = vadd.f32 %v154, %v158
        %v161 = vadd.f32 %v155, %v159
        %vm162 = vcmp.eq.s32.totalorder %v142, 3
        %vm163 = vcmp.eq.s32.totalorder %v143, 3
        %v164 = vsel %vm162, 0.23647602, 0.0
        %v165 = vsel %vm163, 0.23647602, 0.0
        %v166 = vadd.f32 %v160, %v164
        %v167 = vadd.f32 %v161, %v165
        %vm168 = vcmp.eq.s32.totalorder %v142, 4
        %vm169 = vcmp.eq.s32.totalorder %v143, 4
        %v170 = vsel %vm168, 0.111703366, 0.0
        %v171 = vsel %vm169, 0.111703366, 0.0
        %v172 = vadd.f32 %v166, %v170
        %v173 = vadd.f32 %v167, %v171
        %v174 = vsub.s32 %v141, %v138
        %v175 = vsub.s32 %v141, %v139
        %vm176 = vcmp.eq.s32.totalorder %v174, 0
        %vm177 = vcmp.eq.s32.totalorder %v175, 0
        %v178 = vsel %vm176, 0.111703366, 0.0
        %v179 = vsel %vm177, 0.111703366, 0.0
        %v180 = vadd.f32 %v178, 0.0
        %v181 = vadd.f32 %v179, 0.0
        %vm182 = vcmp.eq.s32.totalorder %v174, 1
        %vm183 = vcmp.eq.s32.totalorder %v175, 1
        %v184 = vsel %vm182, 0.23647602, 0.0
        %v185 = vsel %vm183, 0.23647602, 0.0
        %v186 = vadd.f32 %v180, %v184
        %v187 = vadd.f32 %v181, %v185
        %vm188 = vcmp.eq.s32.totalorder %v174, 2
        %vm189 = vcmp.eq.s32.totalorder %v175, 2
        %v190 = vsel %vm188, 0.30364123, 0.0
        %v191 = vsel %vm189, 0.30364123, 0.0
        %v192 = vadd.f32 %v186, %v190
        %v193 = vadd.f32 %v187, %v191
        %vm194 = vcmp.eq.s32.totalorder %v174, 3
        %vm195 = vcmp.eq.s32.totalorder %v175, 3
        %v196 = vsel %vm194, 0.23647602, 0.0
        %v197 = vsel %vm195, 0.23647602, 0.0
        %v198 = vadd.f32 %v192, %v196
        %v199 = vadd.f32 %v193, %v197
        %vm200 = vcmp.eq.s32.totalorder %v174, 4
        %vm201 = vcmp.eq.s32.totalorder %v175, 4
        %v202 = vsel %vm200, 0.111703366, 0.0
        %v203 = vsel %vm201, 0.111703366, 0.0
        %v204 = vadd.f32 %v198, %v202
        %v205 = vadd.f32 %v199, %v203
        %v206 = vld [vmem:[%s113] sm:$0xff]
        %v207 = vld [vmem:[%s113 + $0x8] sm:$0xff]
        %vm208 = vcmask 130048
        %v210 = vsel %vm208, %v206, 0
        %v213 = vsel %vm208, %v207, 0
        %215 = vmatprep.subr.mxu0 0.0
        %216 = vmatpush1.msra.mxu0 %v172
        %217 = vmatprep.subr.mxu0 0.0
        %218 = vmatpush1.msra.mxu0 %v173
        %219 = vmatprep.subr.mxu0 0.0
        %220 = vmatpush1.msra.mxu0 0.0
        %221 = vmatprep.subr.mxu0 0.0
        %222 = vmatpush1.msra.mxu0 0.0
        %223 = vmatprep.subr.mxu0 0.0
        %224 = vmatpush1.msra.mxu0 0.0
        %225 = vmatprep.subr.mxu0 0.0
        %226 = vmatpush1.msra.mxu0 0.0
        %227 = vmatprep.subr.mxu0 0.0
        %228 = vmatpush1.msra.mxu0 0.0
        %229 = vmatprep.subr.mxu0 0.0
        %230 = vmatpush1.msra.mxu0 0.0
        %231 = vmatprep.subr.mxu0 0.0
        %232 = vmatpush1.msra.mxu0 0.0
        %233 = vmatprep.subr.mxu0 0.0
        %234 = vmatpush1.msra.mxu0 0.0
        %235 = vmatprep.subr.mxu0 0.0
        %236 = vmatpush1.msra.mxu0 0.0
        %237 = vmatprep.subr.mxu0 0.0
        %238 = vmatpush1.msra.mxu0 0.0
        %239 = vmatprep.subr.mxu0 0.0
        %240 = vmatpush1.msra.mxu0 0.0
        %241 = vmatprep.subr.mxu0 0.0
        %242 = vmatpush1.msra.mxu0 0.0
        %243 = vmatprep.subr.mxu0 0.0
        %244 = vmatpush1.msra.mxu0 0.0
        %245 = vmatprep.subr.mxu0 0.0
        %246 = vmatpush1.msra.mxu0 0.0
        %247 = vmatprep.subr.mxu0 0.0
        %248 = vmatpush1.msra.mxu0 0.0
        %249 = vmatprep.subr.mxu0 0.0
        %250 = vmatpush1.msra.mxu0 0.0
        %251 = vmatprep.subr.mxu0 0.0
        %252 = vmatpush1.msra.mxu0 0.0
        %253 = vmatprep.subr.mxu0 0.0
        %254 = vmatpush1.msra.mxu0 0.0
        %255 = vmatprep.subr.mxu0 0.0
        %256 = vmatpush1.msra.mxu0 0.0
        %257 = vmatprep.subr.mxu0 0.0
        %258 = vmatpush1.msra.mxu0 0.0
        %259 = vmatprep.subr.mxu0 0.0
        %260 = vmatpush1.msra.mxu0 0.0
        %261 = vmatprep.subr.mxu0 0.0
        %262 = vmatpush1.msra.mxu0 0.0
        %263 = vmatprep.subr.mxu0 0.0
        %264 = vmatpush1.msra.mxu0 0.0
        %265 = vmatprep.subr.mxu0 0.0
        %266 = vmatpush1.msra.mxu0 0.0
        %267 = vmatprep.subr.mxu0 0.0
        %268 = vmatpush1.msra.mxu0 0.0
        %269 = vmatprep.subr.mxu0 0.0
        %270 = vmatpush1.msra.mxu0 0.0
        %271 = vmatprep.subr.mxu0 0.0
        %272 = vmatpush1.msra.mxu0 0.0
        %273 = vmatprep.subr.mxu0 0.0
        %274 = vmatpush1.msra.mxu0 0.0
        %275 = vmatprep.subr.mxu0 0.0
        %276 = vmatpush1.msra.mxu0 0.0
        %277 = vmatprep.subr.mxu0 0.0
        %278 = vmatpush1.msra.mxu0 0.0
        %279 = vmatprep.mubr.f32.mxu0 0.0
        %280 = vmatmul.mubr.f32.gmra.mrb[0].mxu0 %v210
        %v281 = vpop.f32.mrb[0].mxu0
        %v282 = vadd.f32 0.0, %v281
        %v283 = vpop.f32.mrb[0].mxu0
        %284 = vmatprep.mubr.f32.mxu0 0.0
        %285 = vmatmul.mubr.f32.gmra.mrb[0].mxu0 %v213
        %v286 = vpop.f32.mrb[0].mxu0
        %v287 = vadd.f32 0.0, %v286
        %v288 = vpop.f32.mrb[0].mxu0
        %289 = vdwg.mxu0
        %v291 = vsel %vm208, %v204, 0
        %v294 = vsel %vm208, %v205, 0
        %296 = vmatprep.subr.mxu0 0.0
        %297 = vmatpush1.msra.mxu0 %v282
        %298 = vmatprep.subr.mxu0 0.0
        %299 = vmatpush1.msra.mxu0 %v287
        %300 = vmatprep.subr.mxu0 0.0
        %301 = vmatpush1.msra.mxu0 0.0
        %302 = vmatprep.subr.mxu0 0.0
        %303 = vmatpush1.msra.mxu0 0.0
        %304 = vmatprep.subr.mxu0 0.0
        %305 = vmatpush1.msra.mxu0 0.0
        %306 = vmatprep.subr.mxu0 0.0
        %307 = vmatpush1.msra.mxu0 0.0
        %308 = vmatprep.subr.mxu0 0.0
        %309 = vmatpush1.msra.mxu0 0.0
        %310 = vmatprep.subr.mxu0 0.0
        %311 = vmatpush1.msra.mxu0 0.0
        %312 = vmatprep.subr.mxu0 0.0
        %313 = vmatpush1.msra.mxu0 0.0
        %314 = vmatprep.subr.mxu0 0.0
        %315 = vmatpush1.msra.mxu0 0.0
        %316 = vmatprep.subr.mxu0 0.0
        %317 = vmatpush1.msra.mxu0 0.0
        %318 = vmatprep.subr.mxu0 0.0
        %319 = vmatpush1.msra.mxu0 0.0
        %320 = vmatprep.subr.mxu0 0.0
        %321 = vmatpush1.msra.mxu0 0.0
        %322 = vmatprep.subr.mxu0 0.0
        %323 = vmatpush1.msra.mxu0 0.0
        %324 = vmatprep.subr.mxu0 0.0
        %325 = vmatpush1.msra.mxu0 0.0
        %326 = vmatprep.subr.mxu0 0.0
        %327 = vmatpush1.msra.mxu0 0.0
        %328 = vmatprep.subr.mxu0 0.0
        %329 = vmatpush1.msra.mxu0 0.0
        %330 = vmatprep.subr.mxu0 0.0
        %331 = vmatpush1.msra.mxu0 0.0
        %332 = vmatprep.subr.mxu0 0.0
        %333 = vmatpush1.msra.mxu0 0.0
        %334 = vmatprep.subr.mxu0 0.0
        %335 = vmatpush1.msra.mxu0 0.0
        %336 = vmatprep.subr.mxu0 0.0
        %337 = vmatpush1.msra.mxu0 0.0
        %338 = vmatprep.subr.mxu0 0.0
        %339 = vmatpush1.msra.mxu0 0.0
        %340 = vmatprep.subr.mxu0 0.0
        %341 = vmatpush1.msra.mxu0 0.0
        %342 = vmatprep.subr.mxu0 0.0
        %343 = vmatpush1.msra.mxu0 0.0
        %344 = vmatprep.subr.mxu0 0.0
        %345 = vmatpush1.msra.mxu0 0.0
        %346 = vmatprep.subr.mxu0 0.0
        %347 = vmatpush1.msra.mxu0 0.0
        %348 = vmatprep.subr.mxu0 0.0
        %349 = vmatpush1.msra.mxu0 0.0
        %350 = vmatprep.subr.mxu0 0.0
        %351 = vmatpush1.msra.mxu0 0.0
        %352 = vmatprep.subr.mxu0 0.0
        %353 = vmatpush1.msra.mxu0 0.0
        %354 = vmatprep.subr.mxu0 0.0
        %355 = vmatpush1.msra.mxu0 0.0
        %356 = vmatprep.subr.mxu0 0.0
        %357 = vmatpush1.msra.mxu0 0.0
        %358 = vmatprep.subr.mxu0 0.0
        %359 = vmatpush1.msra.mxu0 0.0
        %360 = vmatprep.mubr.f32.mxu0 0.0
        %361 = vmatmul.mubr.f32.gmra.mrb[0].mxu0 %v291
        %v362 = vpop.f32.mrb[0].mxu0
        %v363 = vadd.f32 0.0, %v362
        %v364 = vpop.f32.mrb[0].mxu0
        %365 = vmatprep.mubr.f32.mxu0 0.0
        %366 = vmatmul.mubr.f32.gmra.mrb[0].mxu0 %v294
        %v367 = vpop.f32.mrb[0].mxu0
        %v368 = vadd.f32 0.0, %v367
        %v369 = vpop.f32.mrb[0].mxu0
        %370 = vdwg.mxu0
        %vm371 = vcmask 97280
        %372 = vst.msk [vmem:[%s136] sm:$0xff] %vm371, %v363
        %vm373 = vcmask 93184
        %374 = vst.msk [vmem:[%s136 + $0x8] sm:$0xf] %vm373, %v368
        %s375 = scalar_lea.vmem %s113, 16 [#allocation2]
        %v376 = vld [vmem:[%s375] sm:$0xff]
        %v377 = vld [vmem:[%s375 + $0x8] sm:$0xff]
        %v379 = vsel %vm208, %v376, 0
        %v382 = vsel %vm208, %v377, 0
        %384 = vmatprep.subr.mxu0 0.0
        %385 = vmatpush1.msra.mxu0 %v172
        %386 = vmatprep.subr.mxu0 0.0
        %387 = vmatpush1.msra.mxu0 %v173
        %388 = vmatprep.subr.mxu0 0.0
        %389 = vmatpush1.msra.mxu0 0.0
        %390 = vmatprep.subr.mxu0 0.0
        %391 = vmatpush1.msra.mxu0 0.0
        %392 = vmatprep.subr.mxu0 0.0
        %393 = vmatpush1.msra.mxu0 0.0
        %394 = vmatprep.subr.mxu0 0.0
        %395 = vmatpush1.msra.mxu0 0.0
        %396 = vmatprep.subr.mxu0 0.0
        %397 = vmatpush1.msra.mxu0 0.0
        %398 = vmatprep.subr.mxu0 0.0
        %399 = vmatpush1.msra.mxu0 0.0
        %400 = vmatprep.subr.mxu0 0.0
        %401 = vmatpush1.msra.mxu0 0.0
        %402 = vmatprep.subr.mxu0 0.0
        %403 = vmatpush1.msra.mxu0 0.0
        %404 = vmatprep.subr.mxu0 0.0
        %405 = vmatpush1.msra.mxu0 0.0
        %406 = vmatprep.subr.mxu0 0.0
        %407 = vmatpush1.msra.mxu0 0.0
        %408 = vmatprep.subr.mxu0 0.0
        %409 = vmatpush1.msra.mxu0 0.0
        %410 = vmatprep.subr.mxu0 0.0
        %411 = vmatpush1.msra.mxu0 0.0
        %412 = vmatprep.subr.mxu0 0.0
        %413 = vmatpush1.msra.mxu0 0.0
        %414 = vmatprep.subr.mxu0 0.0
        %415 = vmatpush1.msra.mxu0 0.0
        %416 = vmatprep.subr.mxu0 0.0
        %417 = vmatpush1.msra.mxu0 0.0
        %418 = vmatprep.subr.mxu0 0.0
        %419 = vmatpush1.msra.mxu0 0.0
        %420 = vmatprep.subr.mxu0 0.0
        %421 = vmatpush1.msra.mxu0 0.0
        %422 = vmatprep.subr.mxu0 0.0
        %423 = vmatpush1.msra.mxu0 0.0
        %424 = vmatprep.subr.mxu0 0.0
        %425 = vmatpush1.msra.mxu0 0.0
        %426 = vmatprep.subr.mxu0 0.0
        %427 = vmatpush1.msra.mxu0 0.0
        %428 = vmatprep.subr.mxu0 0.0
        %429 = vmatpush1.msra.mxu0 0.0
        %430 = vmatprep.subr.mxu0 0.0
        %431 = vmatpush1.msra.mxu0 0.0
        %432 = vmatprep.subr.mxu0 0.0
        %433 = vmatpush1.msra.mxu0 0.0
        %434 = vmatprep.subr.mxu0 0.0
        %435 = vmatpush1.msra.mxu0 0.0
        %436 = vmatprep.subr.mxu0 0.0
        %437 = vmatpush1.msra.mxu0 0.0
        %438 = vmatprep.subr.mxu0 0.0
        %439 = vmatpush1.msra.mxu0 0.0
        %440 = vmatprep.subr.mxu0 0.0
        %441 = vmatpush1.msra.mxu0 0.0
        %442 = vmatprep.subr.mxu0 0.0
        %443 = vmatpush1.msra.mxu0 0.0
        %444 = vmatprep.subr.mxu0 0.0
        %445 = vmatpush1.msra.mxu0 0.0
        %446 = vmatprep.subr.mxu0 0.0
        %447 = vmatpush1.msra.mxu0 0.0
        %448 = vmatprep.mubr.f32.mxu0 0.0
        %449 = vmatmul.mubr.f32.gmra.mrb[0].mxu0 %v379
        %v450 = vpop.f32.mrb[0].mxu0
        %v451 = vadd.f32 0.0, %v450
        %v452 = vpop.f32.mrb[0].mxu0
        %453 = vmatprep.mubr.f32.mxu0 0.0
        %454 = vmatmul.mubr.f32.gmra.mrb[0].mxu0 %v382
        %v455 = vpop.f32.mrb[0].mxu0
        %v456 = vadd.f32 0.0, %v455
        %v457 = vpop.f32.mrb[0].mxu0
        %458 = vdwg.mxu0
        %459 = vmatprep.subr.mxu0 0.0
        %460 = vmatpush1.msra.mxu0 %v451
        %461 = vmatprep.subr.mxu0 0.0
        %462 = vmatpush1.msra.mxu0 %v456
        %463 = vmatprep.subr.mxu0 0.0
        %464 = vmatpush1.msra.mxu0 0.0
        %465 = vmatprep.subr.mxu0 0.0
        %466 = vmatpush1.msra.mxu0 0.0
        %467 = vmatprep.subr.mxu0 0.0
        %468 = vmatpush1.msra.mxu0 0.0
        %469 = vmatprep.subr.mxu0 0.0
        %470 = vmatpush1.msra.mxu0 0.0
        %471 = vmatprep.subr.mxu0 0.0
        %472 = vmatpush1.msra.mxu0 0.0
        %473 = vmatprep.subr.mxu0 0.0
        %474 = vmatpush1.msra.mxu0 0.0
        %475 = vmatprep.subr.mxu0 0.0
        %476 = vmatpush1.msra.mxu0 0.0
        %477 = vmatprep.subr.mxu0 0.0
        %478 = vmatpush1.msra.mxu0 0.0
        %479 = vmatprep.subr.mxu0 0.0
        %480 = vmatpush1.msra.mxu0 0.0
        %481 = vmatprep.subr.mxu0 0.0
        %482 = vmatpush1.msra.mxu0 0.0
        %483 = vmatprep.subr.mxu0 0.0
        %484 = vmatpush1.msra.mxu0 0.0
        %485 = vmatprep.subr.mxu0 0.0
        %486 = vmatpush1.msra.mxu0 0.0
        %487 = vmatprep.subr.mxu0 0.0
        %488 = vmatpush1.msra.mxu0 0.0
        %489 = vmatprep.subr.mxu0 0.0
        %490 = vmatpush1.msra.mxu0 0.0
        %491 = vmatprep.subr.mxu0 0.0
        %492 = vmatpush1.msra.mxu0 0.0
        %493 = vmatprep.subr.mxu0 0.0
        %494 = vmatpush1.msra.mxu0 0.0
        %495 = vmatprep.subr.mxu0 0.0
        %496 = vmatpush1.msra.mxu0 0.0
        %497 = vmatprep.subr.mxu0 0.0
        %498 = vmatpush1.msra.mxu0 0.0
        %499 = vmatprep.subr.mxu0 0.0
        %500 = vmatpush1.msra.mxu0 0.0
        %501 = vmatprep.subr.mxu0 0.0
        %502 = vmatpush1.msra.mxu0 0.0
        %503 = vmatprep.subr.mxu0 0.0
        %504 = vmatpush1.msra.mxu0 0.0
        %505 = vmatprep.subr.mxu0 0.0
        %506 = vmatpush1.msra.mxu0 0.0
        %507 = vmatprep.subr.mxu0 0.0
        %508 = vmatpush1.msra.mxu0 0.0
        %509 = vmatprep.subr.mxu0 0.0
        %510 = vmatpush1.msra.mxu0 0.0
        %511 = vmatprep.subr.mxu0 0.0
        %512 = vmatpush1.msra.mxu0 0.0
        %513 = vmatprep.subr.mxu0 0.0
        %514 = vmatpush1.msra.mxu0 0.0
        %515 = vmatprep.subr.mxu0 0.0
        %516 = vmatpush1.msra.mxu0 0.0
        %517 = vmatprep.subr.mxu0 0.0
        %518 = vmatpush1.msra.mxu0 0.0
        %519 = vmatprep.subr.mxu0 0.0
        %520 = vmatpush1.msra.mxu0 0.0
        %521 = vmatprep.subr.mxu0 0.0
        %522 = vmatpush1.msra.mxu0 0.0
        %523 = vmatprep.mubr.f32.mxu0 0.0
        %524 = vmatmul.mubr.f32.gmra.mrb[0].mxu0 %v291
        %v525 = vpop.f32.mrb[0].mxu0
        %v526 = vadd.f32 0.0, %v525
        %v527 = vpop.f32.mrb[0].mxu0
        %528 = vmatprep.mubr.f32.mxu0 0.0
        %529 = vmatmul.mubr.f32.gmra.mrb[0].mxu0 %v294
        %v530 = vpop.f32.mrb[0].mxu0
        %v531 = vadd.f32 0.0, %v530
        %v532 = vpop.f32.mrb[0].mxu0
        %533 = vdwg.mxu0
        %s534 = scalar_lea.vmem %s136, 16
        %535 = vst.msk [vmem:[%s534] sm:$0xff] %vm371, %v526
        %536 = vst.msk [vmem:[%s534 + $0x8] sm:$0xf] %vm373, %v531
        %s537 = scalar_lea.vmem %s113, 32 [#allocation2]
        %v538 = vld [vmem:[%s537] sm:$0xff]
        %v539 = vld [vmem:[%s537 + $0x8] sm:$0xff]
        %v541 = vsel %vm208, %v538, 0
        %v544 = vsel %vm208, %v539, 0
        %546 = vmatprep.subr.mxu0 0.0
        %547 = vmatpush1.msra.mxu0 %v172
        %548 = vmatprep.subr.mxu0 0.0
        %549 = vmatpush1.msra.mxu0 %v173
        %550 = vmatprep.subr.mxu0 0.0
        %551 = vmatpush1.msra.mxu0 0.0
        %552 = vmatprep.subr.mxu0 0.0
        %553 = vmatpush1.msra.mxu0 0.0
        %554 = vmatprep.subr.mxu0 0.0
        %555 = vmatpush1.msra.mxu0 0.0
        %556 = vmatprep.subr.mxu0 0.0
        %557 = vmatpush1.msra.mxu0 0.0
        %558 = vmatprep.subr.mxu0 0.0
        %559 = vmatpush1.msra.mxu0 0.0
        %560 = vmatprep.subr.mxu0 0.0
        %561 = vmatpush1.msra.mxu0 0.0
        %562 = vmatprep.subr.mxu0 0.0
        %563 = vmatpush1.msra.mxu0 0.0
        %564 = vmatprep.subr.mxu0 0.0
        %565 = vmatpush1.msra.mxu0 0.0
        %566 = vmatprep.subr.mxu0 0.0
        %567 = vmatpush1.msra.mxu0 0.0
        %568 = vmatprep.subr.mxu0 0.0
        %569 = vmatpush1.msra.mxu0 0.0
        %570 = vmatprep.subr.mxu0 0.0
        %571 = vmatpush1.msra.mxu0 0.0
        %572 = vmatprep.subr.mxu0 0.0
        %573 = vmatpush1.msra.mxu0 0.0
        %574 = vmatprep.subr.mxu0 0.0
        %575 = vmatpush1.msra.mxu0 0.0
        %576 = vmatprep.subr.mxu0 0.0
        %577 = vmatpush1.msra.mxu0 0.0
        %578 = vmatprep.subr.mxu0 0.0
        %579 = vmatpush1.msra.mxu0 0.0
        %580 = vmatprep.subr.mxu0 0.0
        %581 = vmatpush1.msra.mxu0 0.0
        %582 = vmatprep.subr.mxu0 0.0
        %583 = vmatpush1.msra.mxu0 0.0
        %584 = vmatprep.subr.mxu0 0.0
        %585 = vmatpush1.msra.mxu0 0.0
        %586 = vmatprep.subr.mxu0 0.0
        %587 = vmatpush1.msra.mxu0 0.0
        %588 = vmatprep.subr.mxu0 0.0
        %589 = vmatpush1.msra.mxu0 0.0
        %590 = vmatprep.subr.mxu0 0.0
        %591 = vmatpush1.msra.mxu0 0.0
        %592 = vmatprep.subr.mxu0 0.0
        %593 = vmatpush1.msra.mxu0 0.0
        %594 = vmatprep.subr.mxu0 0.0
        %595 = vmatpush1.msra.mxu0 0.0
        %596 = vmatprep.subr.mxu0 0.0
        %597 = vmatpush1.msra.mxu0 0.0
        %598 = vmatprep.subr.mxu0 0.0
        %599 = vmatpush1.msra.mxu0 0.0
        %600 = vmatprep.subr.mxu0 0.0
        %601 = vmatpush1.msra.mxu0 0.0
        %602 = vmatprep.subr.mxu0 0.0
        %603 = vmatpush1.msra.mxu0 0.0
        %604 = vmatprep.subr.mxu0 0.0
        %605 = vmatpush1.msra.mxu0 0.0
        %606 = vmatprep.subr.mxu0 0.0
        %607 = vmatpush1.msra.mxu0 0.0
        %608 = vmatprep.subr.mxu0 0.0
        %609 = vmatpush1.msra.mxu0 0.0
        %610 = vmatprep.mubr.f32.mxu0 0.0
        %611 = vmatmul.mubr.f32.gmra.mrb[0].mxu0 %v541
        %v612 = vpop.f32.mrb[0].mxu0
        %v613 = vadd.f32 0.0, %v612
        %v614 = vpop.f32.mrb[0].mxu0
        %615 = vmatprep.mubr.f32.mxu0 0.0
        %616 = vmatmul.mubr.f32.gmra.mrb[0].mxu0 %v544
        %v617 = vpop.f32.mrb[0].mxu0
        %v618 = vadd.f32 0.0, %v617
        %v619 = vpop.f32.mrb[0].mxu0
        %620 = vdwg.mxu0
        %621 = vmatprep.subr.mxu0 0.0
        %622 = vmatpush1.msra.mxu0 %v613
        %623 = vmatprep.subr.mxu0 0.0
        %624 = vmatpush1.msra.mxu0 %v618
        %625 = vmatprep.subr.mxu0 0.0
        %626 = vmatpush1.msra.mxu0 0.0
        %627 = vmatprep.subr.mxu0 0.0
        %628 = vmatpush1.msra.mxu0 0.0
        %629 = vmatprep.subr.mxu0 0.0
        %630 = vmatpush1.msra.mxu0 0.0
        %631 = vmatprep.subr.mxu0 0.0
        %632 = vmatpush1.msra.mxu0 0.0
        %633 = vmatprep.subr.mxu0 0.0
        %634 = vmatpush1.msra.mxu0 0.0
        %635 = vmatprep.subr.mxu0 0.0
        %636 = vmatpush1.msra.mxu0 0.0
        %637 = vmatprep.subr.mxu0 0.0
        %638 = vmatpush1.msra.mxu0 0.0
        %639 = vmatprep.subr.mxu0 0.0
        %640 = vmatpush1.msra.mxu0 0.0
        %641 = vmatprep.subr.mxu0 0.0
        %642 = vmatpush1.msra.mxu0 0.0
        %643 = vmatprep.subr.mxu0 0.0
        %644 = vmatpush1.msra.mxu0 0.0
        %645 = vmatprep.subr.mxu0 0.0
        %646 = vmatpush1.msra.mxu0 0.0
        %647 = vmatprep.subr.mxu0 0.0
        %648 = vmatpush1.msra.mxu0 0.0
        %649 = vmatprep.subr.mxu0 0.0
        %650 = vmatpush1.msra.mxu0 0.0
        %651 = vmatprep.subr.mxu0 0.0
        %652 = vmatpush1.msra.mxu0 0.0
        %653 = vmatprep.subr.mxu0 0.0
        %654 = vmatpush1.msra.mxu0 0.0
        %655 = vmatprep.subr.mxu0 0.0
        %656 = vmatpush1.msra.mxu0 0.0
        %657 = vmatprep.subr.mxu0 0.0
        %658 = vmatpush1.msra.mxu0 0.0
        %659 = vmatprep.subr.mxu0 0.0
        %660 = vmatpush1.msra.mxu0 0.0
        %661 = vmatprep.subr.mxu0 0.0
        %662 = vmatpush1.msra.mxu0 0.0
        %663 = vmatprep.subr.mxu0 0.0
        %664 = vmatpush1.msra.mxu0 0.0
        %665 = vmatprep.subr.mxu0 0.0
        %666 = vmatpush1.msra.mxu0 0.0
        %667 = vmatprep.subr.mxu0 0.0
        %668 = vmatpush1.msra.mxu0 0.0
        %669 = vmatprep.subr.mxu0 0.0
        %670 = vmatpush1.msra.mxu0 0.0
        %671 = vmatprep.subr.mxu0 0.0
        %672 = vmatpush1.msra.mxu0 0.0
        %673 = vmatprep.subr.mxu0 0.0
        %674 = vmatpush1.msra.mxu0 0.0
        %675 = vmatprep.subr.mxu0 0.0
        %676 = vmatpush1.msra.mxu0 0.0
        %677 = vmatprep.subr.mxu0 0.0
        %678 = vmatpush1.msra.mxu0 0.0
        %679 = vmatprep.subr.mxu0 0.0
        %680 = vmatpush1.msra.mxu0 0.0
        %681 = vmatprep.subr.mxu0 0.0
        %682 = vmatpush1.msra.mxu0 0.0
        %683 = vmatprep.subr.mxu0 0.0
        %684 = vmatpush1.msra.mxu0 0.0
        %685 = vmatprep.mubr.f32.mxu0 0.0
        %686 = vmatmul.mubr.f32.gmra.mrb[0].mxu0 %v291
        %v687 = vpop.f32.mrb[0].mxu0
        %v688 = vadd.f32 0.0, %v687
        %v689 = vpop.f32.mrb[0].mxu0
        %690 = vmatprep.mubr.f32.mxu0 0.0
        %691 = vmatmul.mubr.f32.gmra.mrb[0].mxu0 %v294
        %v692 = vpop.f32.mrb[0].mxu0
        %v693 = vadd.f32 0.0, %v692
        %v694 = vpop.f32.mrb[0].mxu0
        %695 = vdwg.mxu0
        %s696 = scalar_lea.vmem %s136, 32
        %697 = vst.msk [vmem:[%s696] sm:$0xff] %vm371, %v688
        %698 = vst.msk [vmem:[%s696 + $0x8] sm:$0xf] %vm373, %v693
        %s699 = scalar_lea.vmem %s113, 48 [#allocation2]
        %v700 = vld [vmem:[%s699] sm:$0xff]
        %v701 = vld [vmem:[%s699 + $0x8] sm:$0xff]
        %v703 = vsel %vm208, %v700, 0
        %v706 = vsel %vm208, %v701, 0
        %708 = vmatprep.subr.mxu0 0.0
        %709 = vmatpush1.msra.mxu0 %v172
        %710 = vmatprep.subr.mxu0 0.0
        %711 = vmatpush1.msra.mxu0 %v173
        %712 = vmatprep.subr.mxu0 0.0
        %713 = vmatpush1.msra.mxu0 0.0
        %714 = vmatprep.subr.mxu0 0.0
        %715 = vmatpush1.msra.mxu0 0.0
        %716 = vmatprep.subr.mxu0 0.0
        %717 = vmatpush1.msra.mxu0 0.0
        %718 = vmatprep.subr.mxu0 0.0
        %719 = vmatpush1.msra.mxu0 0.0
        %720 = vmatprep.subr.mxu0 0.0
        %721 = vmatpush1.msra.mxu0 0.0
        %722 = vmatprep.subr.mxu0 0.0
        %723 = vmatpush1.msra.mxu0 0.0
        %724 = vmatprep.subr.mxu0 0.0
        %725 = vmatpush1.msra.mxu0 0.0
        %726 = vmatprep.subr.mxu0 0.0
        %727 = vmatpush1.msra.mxu0 0.0
        %728 = vmatprep.subr.mxu0 0.0
        %729 = vmatpush1.msra.mxu0 0.0
        %730 = vmatprep.subr.mxu0 0.0
        %731 = vmatpush1.msra.mxu0 0.0
        %732 = vmatprep.subr.mxu0 0.0
        %733 = vmatpush1.msra.mxu0 0.0
        %734 = vmatprep.subr.mxu0 0.0
        %735 = vmatpush1.msra.mxu0 0.0
        %736 = vmatprep.subr.mxu0 0.0
        %737 = vmatpush1.msra.mxu0 0.0
        %738 = vmatprep.subr.mxu0 0.0
        %739 = vmatpush1.msra.mxu0 0.0
        %740 = vmatprep.subr.mxu0 0.0
        %741 = vmatpush1.msra.mxu0 0.0
        %742 = vmatprep.subr.mxu0 0.0
        %743 = vmatpush1.msra.mxu0 0.0
        %744 = vmatprep.subr.mxu0 0.0
        %745 = vmatpush1.msra.mxu0 0.0
        %746 = vmatprep.subr.mxu0 0.0
        %747 = vmatpush1.msra.mxu0 0.0
        %748 = vmatprep.subr.mxu0 0.0
        %749 = vmatpush1.msra.mxu0 0.0
        %750 = vmatprep.subr.mxu0 0.0
        %751 = vmatpush1.msra.mxu0 0.0
        %752 = vmatprep.subr.mxu0 0.0
        %753 = vmatpush1.msra.mxu0 0.0
        %754 = vmatprep.subr.mxu0 0.0
        %755 = vmatpush1.msra.mxu0 0.0
        %756 = vmatprep.subr.mxu0 0.0
        %757 = vmatpush1.msra.mxu0 0.0
        %758 = vmatprep.subr.mxu0 0.0
        %759 = vmatpush1.msra.mxu0 0.0
        %760 = vmatprep.subr.mxu0 0.0
        %761 = vmatpush1.msra.mxu0 0.0
        %762 = vmatprep.subr.mxu0 0.0
        %763 = vmatpush1.msra.mxu0 0.0
        %764 = vmatprep.subr.mxu0 0.0
        %765 = vmatpush1.msra.mxu0 0.0
        %766 = vmatprep.subr.mxu0 0.0
        %767 = vmatpush1.msra.mxu0 0.0
        %768 = vmatprep.subr.mxu0 0.0
        %769 = vmatpush1.msra.mxu0 0.0
        %770 = vmatprep.subr.mxu0 0.0
        %771 = vmatpush1.msra.mxu0 0.0
        %772 = vmatprep.mubr.f32.mxu0 0.0
        %773 = vmatmul.mubr.f32.gmra.mrb[0].mxu0 %v703
        %v774 = vpop.f32.mrb[0].mxu0
        %v775 = vadd.f32 0.0, %v774
        %v776 = vpop.f32.mrb[0].mxu0
        %777 = vmatprep.mubr.f32.mxu0 0.0
        %778 = vmatmul.mubr.f32.gmra.mrb[0].mxu0 %v706
        %v779 = vpop.f32.mrb[0].mxu0
        %v780 = vadd.f32 0.0, %v779
        %v781 = vpop.f32.mrb[0].mxu0
        %782 = vdwg.mxu0
        %783 = vmatprep.subr.mxu0 0.0
        %784 = vmatpush1.msra.mxu0 %v775
        %785 = vmatprep.subr.mxu0 0.0
        %786 = vmatpush1.msra.mxu0 %v780
        %787 = vmatprep.subr.mxu0 0.0
        %788 = vmatpush1.msra.mxu0 0.0
        %789 = vmatprep.subr.mxu0 0.0
        %790 = vmatpush1.msra.mxu0 0.0
        %791 = vmatprep.subr.mxu0 0.0
        %792 = vmatpush1.msra.mxu0 0.0
        %793 = vmatprep.subr.mxu0 0.0
        %794 = vmatpush1.msra.mxu0 0.0
        %795 = vmatprep.subr.mxu0 0.0
        %796 = vmatpush1.msra.mxu0 0.0
        %797 = vmatprep.subr.mxu0 0.0
        %798 = vmatpush1.msra.mxu0 0.0
        %799 = vmatprep.subr.mxu0 0.0
        %800 = vmatpush1.msra.mxu0 0.0
        %801 = vmatprep.subr.mxu0 0.0
        %802 = vmatpush1.msra.mxu0 0.0
        %803 = vmatprep.subr.mxu0 0.0
        %804 = vmatpush1.msra.mxu0 0.0
        %805 = vmatprep.subr.mxu0 0.0
        %806 = vmatpush1.msra.mxu0 0.0
        %807 = vmatprep.subr.mxu0 0.0
        %808 = vmatpush1.msra.mxu0 0.0
        %809 = vmatprep.subr.mxu0 0.0
        %810 = vmatpush1.msra.mxu0 0.0
        %811 = vmatprep.subr.mxu0 0.0
        %812 = vmatpush1.msra.mxu0 0.0
        %813 = vmatprep.subr.mxu0 0.0
        %814 = vmatpush1.msra.mxu0 0.0
        %815 = vmatprep.subr.mxu0 0.0
        %816 = vmatpush1.msra.mxu0 0.0
        %817 = vmatprep.subr.mxu0 0.0
        %818 = vmatpush1.msra.mxu0 0.0
        %819 = vmatprep.subr.mxu0 0.0
        %820 = vmatpush1.msra.mxu0 0.0
        %821 = vmatprep.subr.mxu0 0.0
        %822 = vmatpush1.msra.mxu0 0.0
        %823 = vmatprep.subr.mxu0 0.0
        %824 = vmatpush1.msra.mxu0 0.0
        %825 = vmatprep.subr.mxu0 0.0
        %826 = vmatpush1.msra.mxu0 0.0
        %827 = vmatprep.subr.mxu0 0.0
        %828 = vmatpush1.msra.mxu0 0.0
        %829 = vmatprep.subr.mxu0 0.0
        %830 = vmatpush1.msra.mxu0 0.0
        %831 = vmatprep.subr.mxu0 0.0
        %832 = vmatpush1.msra.mxu0 0.0
        %833 = vmatprep.subr.mxu0 0.0
        %834 = vmatpush1.msra.mxu0 0.0
        %835 = vmatprep.subr.mxu0 0.0
        %836 = vmatpush1.msra.mxu0 0.0
        %837 = vmatprep.subr.mxu0 0.0
        %838 = vmatpush1.msra.mxu0 0.0
        %839 = vmatprep.subr.mxu0 0.0
        %840 = vmatpush1.msra.mxu0 0.0
        %841 = vmatprep.subr.mxu0 0.0
        %842 = vmatpush1.msra.mxu0 0.0
        %843 = vmatprep.subr.mxu0 0.0
        %844 = vmatpush1.msra.mxu0 0.0
        %845 = vmatprep.subr.mxu0 0.0
        %846 = vmatpush1.msra.mxu0 0.0
        %847 = vmatprep.mubr.f32.mxu0 0.0
        %848 = vmatmul.mubr.f32.gmra.mrb[0].mxu0 %v291
        %v849 = vpop.f32.mrb[0].mxu0
        %v850 = vadd.f32 0.0, %v849
        %v851 = vpop.f32.mrb[0].mxu0
        %852 = vmatprep.mubr.f32.mxu0 0.0
        %853 = vmatmul.mubr.f32.gmra.mrb[0].mxu0 %v294
        %v854 = vpop.f32.mrb[0].mxu0
        %v855 = vadd.f32 0.0, %v854
        %v856 = vpop.f32.mrb[0].mxu0
        %857 = vdwg.mxu0
        %s858 = scalar_lea.vmem %s136, 48
        %859 = vst.msk [vmem:[%s858] sm:$0xff] %vm371, %v850
        %860 = vst.msk [vmem:[%s858 + $0x8] sm:$0xf] %vm373, %v855
        %p861 = scmp.lt.s32.totalorder %s15, 1
        %s862 = scalar_select %p861, %s15, 1
        %s863 = smul.addr %s862, 8
        %s864 = smul.addr %s863, 8
        %s865 = scalar_lea.vmem %s1, %s864
        // Predicated region
        $region29: #{tpu_custom_call.1} parent=23 // pred_check
          %p866 = pneg %p59
        $region30: #{tpu_custom_call.1} parent=23 // pred_check_branch
          %868 = sbr.rel (%p866) target = $region32
        $region31: #{tpu_custom_call.1} parent=23 // pred_region
          _
        $region32: #{tpu_custom_call.1} parent=23 // pred_fallthru
          _
      $region24: #{tpu_custom_call.1} parent=5 // pred_fallthru
        _
      %p869 = scmp.le.s32.totalorder 2, %s10
      // Predicated region
      $region33: #{tpu_custom_call.1} parent=5 // pred_check
        %p870 = pneg %p869
      $region34: #{tpu_custom_call.1} parent=5 // pred_check_branch
        %872 = sbr.rel (%p870) target = $region36
      $region35: #{tpu_custom_call.1} parent=5 // pred_region
        %s873 = ssub.s32 %s10, 2
        // Predicated region
        $region37: #{tpu_custom_call.1} parent=35 // pred_check
          %p874 = pneg %p65
        $region38: #{tpu_custom_call.1} parent=35 // pred_check_branch
          %876 = sbr.rel (%p874) target = $region40
        $region39: #{tpu_custom_call.1} parent=35 // pred_region
          %p877 = scmp.lt.s32.totalorder %s16, 1
          %s878 = scalar_select %p877, %s16, 1
          %s879 = smul.addr %s878, 8
          %s880 = smul.addr %s879, 8
          %s881 = scalar_lea.vmem %s1, %s880
        $region40: #{tpu_custom_call.1} parent=35 // pred_fallthru
          _
      $region36: #{tpu_custom_call.1} parent=5 // pred_fallthru
        _
    $region6: #{tpu_custom_call.1} parent=1 // loop_footer
      %s14 = sadd.s32 1, %s10
    $region7: #{tpu_custom_call.1} parent=1 // loop_footer_branch
      %9 = sbr.rel target = $region3
    $region8: #{tpu_custom_call.1} parent=1 // loop_exit
      _
    %882 = vsyncpa [#allocation3], 1
    %s883 = scalar_lea.sflag [#allocation3], 1
    %884 = vsyncpa %s883, 1

</llo_original>
